<compile_context>
chip_gen: v5e
topology: v5e:2x2
jax: 0.10.0
libtpu: 0.0.40
codegen_flags: <defaults>
</compile_context>

<pallas_src>
import functools

import jax
import jax.numpy as jnp
from jax.experimental import pallas as pl
from jax.experimental.pallas import tpu as pltpu

ALPHA = 0.05
GAMMA = 1.0
LANES = 128
SUB_ROWS = 512                        # compute sub-tile rows inside one grid step
MAX_TILE_BYTES_PER_INPUT = 4 << 20    # per-input DMA tile cap (8192 rows of f32)
NUM_CHUNKS = 2                        # leading "parallel" grid axis
VMEM_LIMIT_BYTES = 32 << 20           # 2 inputs x 2 buffers x 4 MiB + temps, all gens


def _round_up(x, m):
    return (x + m - 1) // m * m


def _focal_weight(one_minus_pt, gamma):
    """(1 - pt) ** gamma, specialized at trace time to avoid an EUP pow."""
    if gamma == 0:
        return jnp.ones_like(one_minus_pt)
    if float(gamma) == float(int(gamma)) and 1 <= int(gamma) <= 8:
        w = one_minus_pt
        for _ in range(int(gamma) - 1):
            w = w * one_minus_pt
        return w
    return jnp.power(one_minus_pt, gamma)


def _focal_kernel(x_ref, t_ref, s1_ref, s0_ref, *, alpha, gamma, row_tile,
                  sub_rows, tiles_per_chunk, full_rows, rem_lanes, needs_mask):
    c = pl.program_id(0)
    i = pl.program_id(1)            # sequential reduction axis within a chunk

    @pl.when(i == 0)
    def _():
        s1_ref[...] = jnp.zeros_like(s1_ref)
        s0_ref[...] = jnp.zeros_like(s0_ref)

    tile_row0 = (c * tiles_per_chunk + i) * row_tile   # rows fit int32 (n < 2**31*128)
    n_sub = row_tile // sub_rows

    def accumulate(j, masked):
        r0 = pl.multiple_of(j * sub_rows, 8)
        x = x_ref[pl.ds(r0, sub_rows), :].astype(jnp.float32)
        t = t_ref[pl.ds(r0, sub_rows), :].astype(jnp.float32)

        # BCE(sigmoid(x), t) with PyTorch's log clamp at -100, from a single
        # exp / log1p pair:
        #   log(sigmoid(x))     = -(log1p(e) + relu(-x)),   e = exp(-|x|)
        #   log(1 - sigmoid(x)) = -(log1p(e) + relu( x))
        e = jnp.exp(-jnp.abs(x))
        l1pe = jnp.log1p(e)
        log_p = jnp.maximum(-(l1pe + jnp.maximum(-x, 0.0)), -100.0)
        log_1mp = jnp.maximum(-(l1pe + jnp.maximum(x, 0.0)), -100.0)
        log_pt = t * log_p + (1.0 - t) * log_1mp        # = -BCE = torch.log(pt)

        # pt = exp(-BCE) computed algebraically (saves the second exp):
        #   sigmoid(x) = sel(x>=0, 1, e)/(1+e);  1-sigmoid(x) = sel(x>=0, e, 1)/(1+e)
        pos = x >= 0.0
        num = t * jnp.where(pos, 1.0, e) + (1.0 - t) * jnp.where(pos, e, 1.0)
        pt = num / (1.0 + e)

        w = _focal_weight(1.0 - pt, gamma)
        term1 = (-alpha) * w * (t * log_pt)                  # positive-class term
        term0 = (-(1.0 - alpha)) * w * ((1.0 - t) * log_pt)  # negative-class term

        if masked:
            # Row-granular mask: covers zero padding, partial-block garbage and
            # fully out-of-range tiles alike; exact zero contribution for tail.
            row = (tile_row0 + r0
                   + jax.lax.broadcasted_iota(jnp.int32, (sub_rows, LANES), 0))
            valid = row < full_rows
            if rem_lanes:
                lane = jax.lax.broadcasted_iota(jnp.int32, (sub_rows, LANES), 1)
                valid = valid | ((row == full_rows) & (lane < rem_lanes))
            term1 = jnp.where(valid, term1, 0.0)
            term0 = jnp.where(valid, term0, 0.0)

        # (8, 128) vector accumulators directly in the resident output block:
        # pure VPU adds, no cross-lane reduce or scalar RMW per step.
        s1_ref[0] += jnp.sum(term1.reshape(sub_rows // 8, 8, LANES), axis=0)
        s0_ref[0] += jnp.sum(term0.reshape(sub_rows // 8, 8, LANES), axis=0)

    if needs_mask:
        tile_clean = tile_row0 + row_tile <= full_rows

        @pl.when(tile_clean)
        def _():
            @pl.loop(0, n_sub)
            def _(j):
                accumulate(j, masked=False)

        @pl.when(jnp.logical_not(tile_clean))
        def _():
            @pl.loop(0, n_sub)
            def _(j):
                accumulate(j, masked=True)
    else:
        @pl.loop(0, n_sub)
        def _(j):
            accumulate(j, masked=False)


def focal_loss(inputs, targets, alpha=ALPHA, gamma=GAMMA, reduce=True):
    """Mirrors FocalLoss.forward (logits=False). Returns (loss, mean1, mean0).

    mean1 / mean0 are the two component means the PyTorch module prints.
    """
    if not reduce:
        # TODO(synk): reduce=False (per-element map) needs an elementwise kernel
        # with a full-shape output; only the reduced path is implemented here.
        raise NotImplementedError("only reduce=True is implemented in the Pallas kernel")
    assert inputs.shape == targets.shape

    n_elems = inputs.size
    full_rows, rem = divmod(n_elems, LANES)   # fully-valid rows / ragged tail lanes
    rows = full_rows + (1 if rem else 0)

    x_flat = inputs.reshape(-1)
    t_flat = targets.reshape(-1)

    # ---- tiling -------------------------------------------------------------
    sub_rows = _round_up(rows, 8) if rows <= SUB_ROWS else SUB_ROWS
    n_sub_total = int(pl.cdiv(rows, sub_rows))

    itemsize = max(jnp.dtype(x_flat.dtype).itemsize, jnp.dtype(t_flat.dtype).itemsize)
    max_row_tile = max(sub_rows,
                       MAX_TILE_BYTES_PER_INPUT // (LANES * itemsize) // sub_rows * sub_rows)
    max_sub_per_tile = max(1, max_row_tile // sub_rows)

    num_chunks = NUM_CHUNKS if n_sub_total >= NUM_CHUNKS else 1
    n_tiles = _round_up(max(num_chunks, int(pl.cdiv(n_sub_total, max_sub_per_tile))),
                        num_chunks)
    sub_per_tile = int(pl.cdiv(n_sub_total, n_tiles))
    if (n_tiles - 1) * sub_per_tile >= n_sub_total:
        # Rounding the tile count up to the chunk count would leave a fully
        # out-of-range trailing block; fall back to one chunk (provably never
        # produces one).
        num_chunks = 1
        n_tiles = int(pl.cdiv(n_sub_total, max_sub_per_tile))
        sub_per_tile = int(pl.cdiv(n_sub_total, n_tiles))
    tiles_per_chunk = n_tiles // num_chunks
    row_tile = sub_per_tile * sub_rows
    coverage_rows = n_tiles * row_tile

    # ---- layout -------------------------------------------------------------
    # Lane-aligned inputs: pure metadata reshape, zero extra HBM traffic; the
    # grid may over-cover the rows and the kernel masks the ragged tail tile.
    # Only when n_elems % 128 != 0 do we pay one pad copy (then pad straight
    # to the grid coverage so every block is fully in bounds).
    pad_rows = coverage_rows if rem != 0 else rows
    pad_elems = pad_rows * LANES - n_elems
    if pad_elems:
        x_flat = jnp.pad(x_flat, (0, pad_elems))
        t_flat = jnp.pad(t_flat, (0, pad_elems))
    x2d = x_flat.reshape(pad_rows, LANES)
    t2d = t_flat.reshape(pad_rows, LANES)

    needs_mask = not (rem == 0 and coverage_rows <= full_rows)

    kernel = functools.partial(
        _focal_kernel,
        alpha=float(alpha),
        gamma=float(gamma),
        row_tile=row_tile,
        sub_rows=sub_rows,
        tiles_per_chunk=tiles_per_chunk,
        full_rows=full_rows,
        rem_lanes=rem,
        needs_mask=needs_mask,
    )

    in_bytes = x2d.size * x2d.dtype.itemsize + t2d.size * t2d.dtype.itemsize
    cost = pl.CostEstimate(
        flops=30 * coverage_rows * LANES,
        transcendentals=2 * coverage_rows * LANES,
        bytes_accessed=in_bytes + 2 * num_chunks * 8 * LANES * 4,
    )

    s1, s0 = pl.pallas_call(
        kernel,
        out_shape=(
            jax.ShapeDtypeStruct((num_chunks, 8, LANES), jnp.float32),
            jax.ShapeDtypeStruct((num_chunks, 8, LANES), jnp.float32),
        ),
        grid_spec=pltpu.PrefetchScalarGridSpec(
            num_scalar_prefetch=0,
            grid=(num_chunks, tiles_per_chunk),
            in_specs=[
                pl.BlockSpec((row_tile, LANES),
                             lambda c, i: (c * tiles_per_chunk + i, 0)),
                pl.BlockSpec((row_tile, LANES),
                             lambda c, i: (c * tiles_per_chunk + i, 0)),
            ],
            out_specs=[
                pl.BlockSpec((1, 8, LANES), lambda c, i: (c, 0, 0)),
                pl.BlockSpec((1, 8, LANES), lambda c, i: (c, 0, 0)),
            ],
        ),
        compiler_params=pltpu.CompilerParams(
            # NOTE: on v7x the leading axis could use pltpu.CORE_PARALLEL for a
            # forced per-TensorCore split; "parallel" keeps the same code valid
            # on single-core generations.
            dimension_semantics=("parallel", "arbitrary"),
            vmem_limit_bytes=VMEM_LIMIT_BYTES,
        ),
        cost_estimate=cost,
    )(x2d, t2d)

    mean1 = jnp.sum(s1) / n_elems  # what the module prints as '1:'
    mean0 = jnp.sum(s0) / n_elems  # what the module prints as '0:'
    loss = mean1 + mean0           # torch.mean(F_loss), since F_loss = term1 + term0
    return loss, mean1, mean0


def _reference(inputs, targets, alpha=ALPHA, gamma=GAMMA):
    p = jax.nn.sigmoid(inputs.astype(jnp.float32))
    t = targets.astype(jnp.float32)
    log_p = jnp.maximum(jnp.log(p), -100.0)
    log_1mp = jnp.maximum(jnp.log1p(-p), -100.0)
    bce = -(t * log_p + (1.0 - t) * log_1mp)
    pt = jnp.exp(-bce)
    f = (-alpha * (1 - pt) ** gamma * (t * jnp.log(pt))
         - (1 - alpha) * (1 - pt) ** gamma * ((1 - t) * jnp.log(pt)))
    return jnp.mean(f)


if __name__ == "__main__":
    key = jax.random.PRNGKey(0)

    def _run_case(shape, case_key):
        kx, kt = jax.random.split(case_key)
        x = jax.random.normal(kx, shape, dtype=jnp.float32)
        t = (jax.random.uniform(kt, shape) > 0.5).astype(jnp.float32)
        loss, _, _ = focal_loss(x, t)
        loss = jax.block_until_ready(loss)
        ref = _reference(x, t)
        assert jnp.allclose(loss, ref, rtol=1e-5, atol=1e-5), (shape, loss, ref)

    # Main small case (NCHW, segmentation-style use of FocalLoss): lane-aligned,
    # no padding, single chunk, single tile, no masking.
    _run_case((2, 4, 16, 16), jax.random.fold_in(key, 0))

    # Exercises the ragged (n % 128 != 0) pad + gated in-kernel masking path.
    _run_case((2, 3, 37, 53), jax.random.fold_in(key, 1))

    # Exercises the 2-chunk "parallel" path with a partial (unpadded) tail tile
    # (204800 elems -> 1600 rows, grid covers 2048 rows without any HBM pad).
    _run_case((2, 4, 160, 160), jax.random.fold_in(key, 2))

    print("KERNEL_OK")
</pallas_src>

<mosaic_0001>
module attributes {stable_mosaic.version = 11 : i64} {
  func.func @_focal_kernel(%arg0: i32, %arg1: i32, %arg2: memref<16x128xf32, #tpu.memory_space<vmem>>, %arg3: memref<16x128xf32, #tpu.memory_space<vmem>>, %arg4: memref<1x8x128xf32, #tpu.memory_space<vmem>>, %arg5: memref<1x8x128xf32, #tpu.memory_space<vmem>>) attributes {dimension_semantics = [#tpu.dimension_semantics<parallel>, #tpu.dimension_semantics<arbitrary>], iteration_bounds = array<i64: 1, 1>, scalar_prefetch = 0 : i64, scratch_operands = 0 : i64, tpu.core_type = #tpu.core_type<tc>, window_params = [{transform_indices = @transform_0, window_bounds = array<i64: 16, 128>}, {transform_indices = @transform_1, window_bounds = array<i64: 16, 128>}, {transform_indices = @transform_2, window_bounds = array<i64: 1, 8, 128>}, {transform_indices = @transform_3, window_bounds = array<i64: 1, 8, 128>}]} {
    %c0_i32 = arith.constant 0 : i32
    %0 = arith.cmpi eq, %arg1, %c0_i32 : i32
    %1 = arith.extui %0 : i1 to i32
    %c0_i32_0 = arith.constant 0 : i32
    %2 = arith.cmpi ne, %1, %c0_i32_0 : i32
    scf.if %2 {
      %cst_36 = arith.constant 0.000000e+00 : f32
      %79 = vector.broadcast %cst_36 : f32 to vector<1x8x128xf32>
      %c0_37 = arith.constant 0 : index
      %c0_38 = arith.constant 0 : index
      %c0_39 = arith.constant 0 : index
      %80 = vector.load %arg4[%c0_37, %c0_38, %c0_39] : memref<1x8x128xf32, #tpu.memory_space<vmem>>, vector<1x8x128xf32>
      tpu.vector_store %arg4[%c0_37, %c0_38, %c0_39], %79 {strides = array<i32>} : memref<1x8x128xf32, #tpu.memory_space<vmem>>, vector<1x8x128xf32>,
      %cst_40 = arith.constant 0.000000e+00 : f32
      %81 = vector.broadcast %cst_40 : f32 to vector<1x8x128xf32>
      %c0_41 = arith.constant 0 : index
      %c0_42 = arith.constant 0 : index
      %c0_43 = arith.constant 0 : index
      %82 = vector.load %arg5[%c0_41, %c0_42, %c0_43] : memref<1x8x128xf32, #tpu.memory_space<vmem>>, vector<1x8x128xf32>
      tpu.vector_store %arg5[%c0_41, %c0_42, %c0_43], %81 {strides = array<i32>} : memref<1x8x128xf32, #tpu.memory_space<vmem>>, vector<1x8x128xf32>,
    } else {
    }
    %c0_i32_1 = arith.constant 0 : i32
    %c1_i32 = arith.constant 1 : i32
    %3 = arith.muli %c0_i32_1, %c1_i32 : i32
    %c0_i32_2 = arith.constant 0 : i32
    %4 = arith.addi %c0_i32_2, %3 : i32
    %c16_i32 = arith.constant 16 : i32
    %5 = arith.muli %4, %c16_i32 : i32
    %6 = tpu.assume_multiple %5, 8 : i32
    %7 = arith.index_cast %6 : i32 to index
    %c0 = arith.constant 0 : index
    %8 = vector.load %arg2[%7, %c0] : memref<16x128xf32, #tpu.memory_space<vmem>>, vector<16x128xf32>
    %9 = arith.index_cast %6 : i32 to index
    %c0_3 = arith.constant 0 : index
    %10 = vector.load %arg3[%9, %c0_3] : memref<16x128xf32, #tpu.memory_space<vmem>>, vector<16x128xf32>
    %11 = math.absf %8 : vector<16x128xf32>
    %cst = arith.constant 0.000000e+00 : f32
    %12 = vector.broadcast %cst : f32 to vector<16x128xf32>
    %13 = arith.subf %12, %11 : vector<16x128xf32>
    %14 = math.exp %13 : vector<16x128xf32>
    %15 = math.log1p %14 : vector<16x128xf32>
    %cst_4 = arith.constant 0.000000e+00 : f32
    %16 = vector.broadcast %cst_4 : f32 to vector<16x128xf32>
    %17 = arith.subf %16, %8 : vector<16x128xf32>
    %cst_5 = arith.constant 0.000000e+00 : f32
    %18 = vector.broadcast %cst_5 : f32 to vector<16x128xf32>
    %19 = arith.maximumf %17, %18 : vector<16x128xf32>
    %20 = arith.addf %15, %19 : vector<16x128xf32>
    %cst_6 = arith.constant 0.000000e+00 : f32
    %21 = vector.broadcast %cst_6 : f32 to vector<16x128xf32>
    %22 = arith.subf %21, %20 : vector<16x128xf32>
    %cst_7 = arith.constant -1.000000e+02 : f32
    %23 = vector.broadcast %cst_7 : f32 to vector<16x128xf32>
    %24 = arith.maximumf %22, %23 : vector<16x128xf32>
    %cst_8 = arith.constant 0.000000e+00 : f32
    %25 = vector.broadcast %cst_8 : f32 to vector<16x128xf32>
    %26 = arith.maximumf %8, %25 : vector<16x128xf32>
    %27 = arith.addf %15, %26 : vector<16x128xf32>
    %cst_9 = arith.constant 0.000000e+00 : f32
    %28 = vector.broadcast %cst_9 : f32 to vector<16x128xf32>
    %29 = arith.subf %28, %27 : vector<16x128xf32>
    %cst_10 = arith.constant -1.000000e+02 : f32
    %30 = vector.broadcast %cst_10 : f32 to vector<16x128xf32>
    %31 = arith.maximumf %29, %30 : vector<16x128xf32>
    %32 = arith.mulf %10, %24 : vector<16x128xf32>
    %cst_11 = arith.constant 1.000000e+00 : f32
    %33 = vector.broadcast %cst_11 : f32 to vector<16x128xf32>
    %34 = arith.subf %33, %10 : vector<16x128xf32>
    %35 = arith.mulf %34, %31 : vector<16x128xf32>
    %36 = arith.addf %32, %35 : vector<16x128xf32>
    %cst_12 = arith.constant 0.000000e+00 : f32
    %37 = vector.broadcast %cst_12 : f32 to vector<16x128xf32>
    %38 = arith.cmpf oge, %8, %37 : vector<16x128xf32>
    %cst_13 = arith.constant 1.000000e+00 : f32
    %39 = vector.broadcast %cst_13 : f32 to vector<16x128xf32>
    %40 = arith.select %38, %39, %14 : vector<16x128xi1>, vector<16x128xf32>
    %41 = arith.mulf %10, %40 : vector<16x128xf32>
    %cst_14 = arith.constant 1.000000e+00 : f32
    %42 = vector.broadcast %cst_14 : f32 to vector<16x128xf32>
    %43 = arith.subf %42, %10 : vector<16x128xf32>
    %cst_15 = arith.constant 1.000000e+00 : f32
    %44 = vector.broadcast %cst_15 : f32 to vector<16x128xf32>
    %45 = arith.select %38, %14, %44 : vector<16x128xi1>, vector<16x128xf32>
    %46 = arith.mulf %43, %45 : vector<16x128xf32>
    %47 = arith.addf %41, %46 : vector<16x128xf32>
    %cst_16 = arith.constant 1.000000e+00 : f32
    %48 = vector.broadcast %cst_16 : f32 to vector<16x128xf32>
    %49 = arith.addf %48, %14 : vector<16x128xf32>
    %50 = arith.divf %47, %49 : vector<16x128xf32>
    %cst_17 = arith.constant 1.000000e+00 : f32
    %51 = vector.broadcast %cst_17 : f32 to vector<16x128xf32>
    %52 = arith.subf %51, %50 : vector<16x128xf32>
    %cst_18 = arith.constant -5.000000e-02 : f32
    %53 = vector.broadcast %cst_18 : f32 to vector<16x128xf32>
    %54 = arith.mulf %53, %52 : vector<16x128xf32>
    %55 = arith.mulf %10, %36 : vector<16x128xf32>
    %56 = arith.mulf %54, %55 : vector<16x128xf32>
    %cst_19 = arith.constant -0.949999988 : f32
    %57 = vector.broadcast %cst_19 : f32 to vector<16x128xf32>
    %58 = arith.mulf %57, %52 : vector<16x128xf32>
    %cst_20 = arith.constant 1.000000e+00 : f32
    %59 = vector.broadcast %cst_20 : f32 to vector<16x128xf32>
    %60 = arith.subf %59, %10 : vector<16x128xf32>
    %61 = arith.mulf %60, %36 : vector<16x128xf32>
    %62 = arith.mulf %58, %61 : vector<16x128xf32>
    %c0_21 = arith.constant 0 : index
    %c0_22 = arith.constant 0 : index
    %c0_23 = arith.constant 0 : index
    %63 = vector.load %arg4[%c0_21, %c0_22, %c0_23] : memref<1x8x128xf32, #tpu.memory_space<vmem>>, vector<1x8x128xf32>
    %64 = vector.shape_cast %63 : vector<1x8x128xf32> to vector<8x128xf32>
    %65 = vector.shape_cast %56 : vector<16x128xf32> to vector<2x8x128xf32>
    %cst_24 = arith.constant dense<0.000000e+00> : vector<8x128xf32>
    %66 = vector.multi_reduction <add>, %65, %cst_24 [0] : vector<2x8x128xf32> to vector<8x128xf32>
    %67 = arith.addf %64, %66 : vector<8x128xf32>
    %c0_25 = arith.constant 0 : index
    %c0_26 = arith.constant 0 : index
    %c0_27 = arith.constant 0 : index
    %68 = vector.load %arg4[%c0_25, %c0_26, %c0_27] : memref<1x8x128xf32, #tpu.memory_space<vmem>>, vector<1x8x128xf32>
    %69 = vector.shape_cast %68 : vector<1x8x128xf32> to vector<8x128xf32>
    %70 = vector.shape_cast %67 : vector<8x128xf32> to vector<1x8x128xf32>
    tpu.vector_store %arg4[%c0_25, %c0_26, %c0_27], %70 {strides = array<i32>} : memref<1x8x128xf32, #tpu.memory_space<vmem>>, vector<1x8x128xf32>,
    %c0_28 = arith.constant 0 : index
    %c0_29 = arith.constant 0 : index
    %c0_30 = arith.constant 0 : index
    %71 = vector.load %arg5[%c0_28, %c0_29, %c0_30] : memref<1x8x128xf32, #tpu.memory_space<vmem>>, vector<1x8x128xf32>
    %72 = vector.shape_cast %71 : vector<1x8x128xf32> to vector<8x128xf32>
    %73 = vector.shape_cast %62 : vector<16x128xf32> to vector<2x8x128xf32>
    %cst_31 = arith.constant dense<0.000000e+00> : vector<8x128xf32>
    %74 = vector.multi_reduction <add>, %73, %cst_31 [0] : vector<2x8x128xf32> to vector<8x128xf32>
    %75 = arith.addf %72, %74 : vector<8x128xf32>
    %c0_32 = arith.constant 0 : index
    %c0_33 = arith.constant 0 : index
    %c0_34 = arith.constant 0 : index
    %76 = vector.load %arg5[%c0_32, %c0_33, %c0_34] : memref<1x8x128xf32, #tpu.memory_space<vmem>>, vector<1x8x128xf32>
    %77 = vector.shape_cast %76 : vector<1x8x128xf32> to vector<8x128xf32>
    %78 = vector.shape_cast %75 : vector<8x128xf32> to vector<1x8x128xf32>
    tpu.vector_store %arg5[%c0_32, %c0_33, %c0_34], %78 {strides = array<i32>} : memref<1x8x128xf32, #tpu.memory_space<vmem>>, vector<1x8x128xf32>,
    %c1_i32_35 = arith.constant 1 : i32
    return
  }
  func.func @transform_0(%arg0: i32, %arg1: i32) -> (i32, i32) {
    %c1_i32 = arith.constant 1 : i32
    %0 = arith.muli %arg0, %c1_i32 : i32
    %1 = arith.addi %0, %arg1 : i32
    %c0_i32 = arith.constant 0 : i32
    %c0_i32_0 = arith.constant 0 : i32
    return %1, %c0_i32 : i32, i32
  }
  func.func @transform_1(%arg0: i32, %arg1: i32) -> (i32, i32) {
    %c1_i32 = arith.constant 1 : i32
    %0 = arith.muli %arg0, %c1_i32 : i32
    %1 = arith.addi %0, %arg1 : i32
    %c0_i32 = arith.constant 0 : i32
    %c0_i32_0 = arith.constant 0 : i32
    return %1, %c0_i32 : i32, i32
  }
  func.func @transform_2(%arg0: i32, %arg1: i32) -> (i32, i32, i32) {
    %c0_i32 = arith.constant 0 : i32
    %c0_i32_0 = arith.constant 0 : i32
    %c0_i32_1 = arith.constant 0 : i32
    return %arg0, %c0_i32, %c0_i32_0 : i32, i32, i32
  }
  func.func @transform_3(%arg0: i32, %arg1: i32) -> (i32, i32, i32) {
    %c0_i32 = arith.constant 0 : i32
    %c0_i32_0 = arith.constant 0 : i32
    %c0_i32_1 = arith.constant 0 : i32
    return %arg0, %c0_i32, %c0_i32_0 : i32, i32, i32
  }
}

</mosaic_0001>

<llo_original>
// kernel: tpu_custom_call.1
$region0: #{tpu_custom_call.1}
  #allocation0 [shape = 'u32[]', space=smem, size = 0x4, offset = 0x4, fixed_abs, tag = 'smem constant byte address 0x4 - core index']
  #allocation1 [shape = 'u32[72,128]{1,0:T(1,128)}', space=vmem, size = 0x9000, scoped, tag = 'internal scratch']
  %s0 = inlined_call_operand.hbm [shape: f32[16,128], index: 0, kind: input, shape index: {}]
  %s1 = inlined_call_operand.hbm [shape: f32[16,128], index: 1, kind: input, shape index: {}]
  %s2 = inlined_call_operand.hbm [shape: f32[1,8,128], index: 2, kind: output, shape index: {0}]
  %s3 = inlined_call_operand.hbm [shape: f32[1,8,128], index: 3, kind: output, shape index: {1}]
  %4 = xla_tuple %s2, %s3
  %s5 = sld [smem:[#allocation0]]
  $region38: #{tpu_custom_call.1} parent=0
    _
  %s7 = ssub.s32 1, %s5
  %s8 = scalar_select 0, %s7, %s5
  $region1: #{tpu_custom_call.1} parent=0
    #allocation2 [shape = 'u8[8192]{0}', space=vmem, size = 0x2000, scoped, tag = 'input window, operand 0, single buffered']
    #allocation3 [shape = 's32[1]{0}', space=sflag, size = 0x4, scoped, tag = 'scoped memory for tpu_custom_call.1']
    #allocation4 [shape = 's32[1]{0}', space=sflag, size = 0x4, scoped, tag = 'scoped memory for tpu_custom_call.1']
    #allocation5 [shape = 'u8[8192]{0}', space=vmem, size = 0x2000, scoped, tag = 'input window, operand 1, single buffered']
    #allocation6 [shape = 's32[1]{0}', space=sflag, size = 0x4, scoped, tag = 'scoped memory for tpu_custom_call.1']
    #allocation7 [shape = 'u8[4096]{0}', space=vmem, size = 0x1000, scoped, tag = 'output window, operand 0, single buffered']
    #allocation8 [shape = 'u8[4096]{0}', space=vmem, size = 0x1000, scoped, tag = 'output window, operand 1, single buffered']
    #allocation9 [shape = 's32[1]{0}', space=sflag, size = 0x4, scoped, tag = 'scoped memory for tpu_custom_call.1']
    %9 = vsyncpa [#allocation3], 0
    %10 = vsyncpa [#allocation6], 0
    %11 = vsyncpa [#allocation4], 0
    %12 = vsyncpa [#allocation9], 0
    // Predicated region
    $region2: #{tpu_custom_call.1} parent=1 // pred_check
      _
    $region3: #{tpu_custom_call.1} parent=1 // pred_check_branch
      %14 = sbr.rel (0) target = $region5
    $region4: #{tpu_custom_call.1} parent=1 // pred_region
      %s15 = sadd.s32 0, 0
      %s16 = smul.u32 2, %s15
      %18 = vsyncadd [#allocation3], 0
      %s19 = smul.addr %s16, 8
      %s20 = scalar_lea.hbm %s0, %s19
      %s21 = sshll.u32 %s20, 4
      %s22 = int_to_ptr.hbm [resolvable:$true] %s21
      %s23 = sshll.u32 [#allocation2], 4
      %s24 = int_to_ptr.vmem [resolvable:$true] %s23
      %29 = dma.hbm_to_vmem [thread:$0]  %s22, 256, %s24, [#allocation3], 128, 128, 8
    $region5: #{tpu_custom_call.1} parent=1 // pred_fallthru
      _
    // Predicated region
    $region6: #{tpu_custom_call.1} parent=1 // pred_check
      _
    $region7: #{tpu_custom_call.1} parent=1 // pred_check_branch
      %31 = sbr.rel (0) target = $region9
    $region8: #{tpu_custom_call.1} parent=1 // pred_region
      %s32 = sadd.s32 0, 0
      %s33 = smul.u32 2, %s32
      %35 = vsyncadd [#allocation6], 0
      %s36 = smul.addr %s33, 8
      %s37 = scalar_lea.hbm %s1, %s36
      %s38 = sshll.u32 %s37, 4
      %s39 = int_to_ptr.hbm [resolvable:$true] %s38
      %s40 = sshll.u32 [#allocation5], 4
      %s41 = int_to_ptr.vmem [resolvable:$true] %s40
      %46 = dma.hbm_to_vmem [thread:$0]  %s39, 256, %s41, [#allocation6], 128, 128, 8
    $region9: #{tpu_custom_call.1} parent=1 // pred_fallthru
      _
    // Predicated region
    $region10: #{tpu_custom_call.1} parent=1 // pred_check
      _
    $region11: #{tpu_custom_call.1} parent=1 // pred_check_branch
      %48 = sbr.rel (0) target = $region13
    $region12: #{tpu_custom_call.1} parent=1 // pred_region
      %50 = dma.done [#allocation3], 256
    $region13: #{tpu_custom_call.1} parent=1 // pred_fallthru
      _
    // Predicated region
    $region14: #{tpu_custom_call.1} parent=1 // pred_check
      _
    $region15: #{tpu_custom_call.1} parent=1 // pred_check_branch
      %52 = sbr.rel (0) target = $region17
    $region16: #{tpu_custom_call.1} parent=1 // pred_region
      %54 = dma.done [#allocation6], 256
    $region17: #{tpu_custom_call.1} parent=1 // pred_fallthru
      _
    %s55 = sadd.s32 0, 0
    %s56 = smul.u32 2, %s55
    %s57 = sadd.s32 0, 0
    %s58 = smul.u32 2, %s57
    %p59 = scmp.eq.s32.totalorder 0, 0
    // Predicated region
    $region18: #{tpu_custom_call.1} parent=1 // pred_check
      %p60 = pneg %p59
    $region19: #{tpu_custom_call.1} parent=1 // pred_check_branch
      %62 = sbr.rel (%p60) target = $region21
    $region20: #{tpu_custom_call.1} parent=1 // pred_region
      %63 = vst [vmem:[#allocation7] sm:$0xff] 0.0
      %64 = vst [vmem:[#allocation8] sm:$0xff] 0.0
    $region21: #{tpu_custom_call.1} parent=1 // pred_fallthru
      _
    %v65 = vld [vmem:[#allocation2] sm:$0xff]
    %v66 = vld [vmem:[#allocation2 + $0x8] sm:$0xff]
    %v67 = vld [vmem:[#allocation5] sm:$0xff]
    %v68 = vld [vmem:[#allocation5 + $0x8] sm:$0xff]
    %v69 = vand.u32 2147483647, %v65
    %v70 = vand.u32 2147483647, %v66
    %v71 = vsub.f32 0.0, %v69
    %v72 = vsub.f32 0.0, %v70
    %v73 = vmul.f32 %v71, 1.442695
    %v74 = vpow.pop %v73
    %v75 = vmul.f32 %v72, 1.442695
    %v76 = vpow.pop %v75
    %v77 = vadd.f32 %v74, 1.0
    %v78 = vlog2.pop %v77
    %v79 = vmul.f32 %v78, 0.6931472
    %v80 = vmul.f32 -0.5, %v74
    %v81 = vadd.f32 %v80, 1.0
    %v82 = vmul.f32 %v81, %v74
    %v83 = vand.u32 2147483647, %v74
    %vm84 = vcmp.lt.f32.partialorder %v83, 0.0004427343
    %v85 = vsel %vm84, %v82, %v79
    %v86 = vadd.f32 %v76, 1.0
    %v87 = vlog2.pop %v86
    %v88 = vmul.f32 %v87, 0.6931472
    %v89 = vmul.f32 -0.5, %v76
    %v90 = vadd.f32 %v89, 1.0
    %v91 = vmul.f32 %v90, %v76
    %v92 = vand.u32 2147483647, %v76
    %vm93 = vcmp.lt.f32.partialorder %v92, 0.0004427343
    %v94 = vsel %vm93, %v91, %v88
    %v95 = vsub.f32 0.0, %v65
    %v96 = vsub.f32 0.0, %v66
    %v97 = vmax.f32 %v95, 0.0
    %v98 = vmax.f32 %v96, 0.0
    %v99 = vadd.f32 %v85, %v97
    %v100 = vadd.f32 %v94, %v98
    %v101 = vsub.f32 0.0, %v99
    %v102 = vsub.f32 0.0, %v100
    %v103 = vmax.f32 %v101, -100.0
    %v104 = vmax.f32 %v102, -100.0
    %v105 = vmax.f32 %v65, 0.0
    %v106 = vmax.f32 %v66, 0.0
    %v107 = vadd.f32 %v85, %v105
    %v108 = vadd.f32 %v94, %v106
    %v109 = vsub.f32 0.0, %v107
    %v110 = vsub.f32 0.0, %v108
    %v111 = vmax.f32 %v109, -100.0
    %v112 = vmax.f32 %v110, -100.0
    %v113 = vmul.f32 %v67, %v103
    %v114 = vmul.f32 %v68, %v104
    %v115 = vsub.f32 1.0, %v67
    %v116 = vsub.f32 1.0, %v68
    %v117 = vmul.f32 %v115, %v111
    %v118 = vmul.f32 %v116, %v112
    %v119 = vadd.f32 %v113, %v117
    %v120 = vadd.f32 %v114, %v118
    %vm121 = vcmp.ge.f32.partialorder %v65, 0.0
    %vm122 = vcmp.ge.f32.partialorder %v66, 0.0
    %v123 = vsel %vm121, 1.0, %v74
    %v124 = vsel %vm122, 1.0, %v76
    %v125 = vmul.f32 %v67, %v123
    %v126 = vmul.f32 %v68, %v124
    %v127 = vsel %vm121, %v74, 1.0
    %v128 = vsel %vm122, %v76, 1.0
    %v129 = vmul.f32 %v115, %v127
    %v130 = vmul.f32 %v116, %v128
    %v131 = vadd.f32 %v125, %v129
    %v132 = vadd.f32 %v126, %v130
    %v133 = vadd.f32 %v74, 1.0
    %v134 = vadd.f32 %v76, 1.0
    %v135 = vrcp.pop %v133
    %v136 = vmul.f32 %v133, %v135
    %v137 = vsub.f32 1.0, %v136
    %v138 = vmul.f32 %v135, %v137
    %v139 = vadd.f32 %v135, %v138
    %vm140 = vweird.f32 %v133
    %vm141 = vweird.f32 %v135
    %vm142 = vmor %vm140, %vm141
    %v143 = vsel %vm142, %v135, %v139
    %v144 = vand.u32 2147483647, %v133
    %vm145 = vcmp.eq.f32.partialorder %v144, 8.507059e+37
    %v146 = vand.u32 %v133, 2147483648
    %v147 = vor.u32 1.1754944e-38, %v146
    %v148 = vsel %vm145, %v147, %v143
    %v149 = vmul.f32 %v131, %v148
    %v150 = vrcp.pop %v134
    %v151 = vmul.f32 %v134, %v150
    %v152 = vsub.f32 1.0, %v151
    %v153 = vmul.f32 %v150, %v152
    %v154 = vadd.f32 %v150, %v153
    %vm155 = vweird.f32 %v134
    %vm156 = vweird.f32 %v150
    %vm157 = vmor %vm155, %vm156
    %v158 = vsel %vm157, %v150, %v154
    %v159 = vand.u32 2147483647, %v134
    %vm160 = vcmp.eq.f32.partialorder %v159, 8.507059e+37
    %v161 = vand.u32 %v134, 2147483648
    %v162 = vor.u32 1.1754944e-38, %v161
    %v163 = vsel %vm160, %v162, %v158
    %v164 = vmul.f32 %v132, %v163
    %v165 = vsub.f32 1.0, %v149
    %v166 = vsub.f32 1.0, %v164
    %v167 = vmul.f32 %v165, -0.05
    %v168 = vmul.f32 %v166, -0.05
    %v169 = vmul.f32 %v67, %v119
    %v170 = vmul.f32 %v68, %v120
    %v171 = vmul.f32 %v167, %v169
    %v172 = vmul.f32 %v168, %v170
    %v173 = vmul.f32 %v165, -0.95
    %v174 = vmul.f32 %v166, -0.95
    %v175 = vmul.f32 %v115, %v119
    %v176 = vmul.f32 %v116, %v120
    %v177 = vmul.f32 %v173, %v175
    %v178 = vmul.f32 %v174, %v176
    %v179 = vld [vmem:[#allocation7] sm:$0xff]
    %v180 = vadd.f32 %v171, %v172
    %v181 = vadd.f32 %v179, %v180
    %182 = vst [vmem:[#allocation7] sm:$0xff] %v181
    %v183 = vld [vmem:[#allocation8] sm:$0xff]
    %v184 = vadd.f32 %v177, %v178
    %v185 = vadd.f32 %v183, %v184
    %186 = vst [vmem:[#allocation8] sm:$0xff] %v185
    // Predicated region
    $region22: #{tpu_custom_call.1} parent=1 // pred_check
      _
    $region23: #{tpu_custom_call.1} parent=1 // pred_check_branch
      %188 = sbr.rel (0) target = $region25
    $region24: #{tpu_custom_call.1} parent=1 // pred_region
      %190 = vsyncadd [#allocation4], 0
      %s192 = sshll.u32 [#allocation7], 4
      %s193 = int_to_ptr.vmem [resolvable:$true] %s192
      %s194 = sshll.u32 %s2, 4
      %s195 = int_to_ptr.hbm [resolvable:$true] %s194
      %197 = dma.vmem_to_hbm [thread:$0]  %s193, 128, %s195, [#allocation4]
    $region25: #{tpu_custom_call.1} parent=1 // pred_fallthru
      _
    // Predicated region
    $region26: #{tpu_custom_call.1} parent=1 // pred_check
      _
    $region27: #{tpu_custom_call.1} parent=1 // pred_check_branch
      %199 = sbr.rel (0) target = $region29
    $region28: #{tpu_custom_call.1} parent=1 // pred_region
      %201 = vsyncadd [#allocation9], 0
      %s203 = sshll.u32 [#allocation8], 4
      %s204 = int_to_ptr.vmem [resolvable:$true] %s203
      %s205 = sshll.u32 %s3, 4
      %s206 = int_to_ptr.hbm [resolvable:$true] %s205
      %208 = dma.vmem_to_hbm [thread:$0]  %s204, 128, %s206, [#allocation9]
    $region29: #{tpu_custom_call.1} parent=1 // pred_fallthru
      _
    // Predicated region
    $region30: #{tpu_custom_call.1} parent=1 // pred_check
      _
    $region31: #{tpu_custom_call.1} parent=1 // pred_check_branch
      %210 = sbr.rel (0) target = $region33
    $region32: #{tpu_custom_call.1} parent=1 // pred_region
      %212 = dma.done [#allocation4], 128
    $region33: #{tpu_custom_call.1} parent=1 // pred_fallthru
      _
    // Predicated region
    $region34: #{tpu_custom_call.1} parent=1 // pred_check
      _
    $region35: #{tpu_custom_call.1} parent=1 // pred_check_branch
      %214 = sbr.rel (0) target = $region37
    $region36: #{tpu_custom_call.1} parent=1 // pred_region
      %216 = dma.done [#allocation9], 128
    $region37: #{tpu_custom_call.1} parent=1 // pred_fallthru
      _
    %217 = vsyncpa [#allocation3], 1
    %218 = vsyncpa [#allocation6], 1
    %219 = vsyncpa [#allocation4], 1
    %220 = vsyncpa [#allocation9], 1

</llo_original>
